<compile_context>
chip_gen: v6e
topology: v6e:2x2x1
jax: 0.10.0
libtpu: 0.0.40
codegen_flags: <defaults>
</compile_context>

<pallas_src>
import functools

import jax
import jax.numpy as jnp
import numpy as np
from jax import lax
from jax.experimental import pallas as pl
from jax.experimental.pallas import tpu as pltpu


def _conv3x3_prelu_kernel(prev_ref, cur_ref, next_ref, w_ref, alpha_ref,
                          o_ref, slab_ref, col_ref, *, W, TH):
    # prev/cur/next_ref: (1, Cin, TH*W)  row blocks t-1 / t / t+1 (clamped)
    # w_ref:             (Cout, 9*Cin)   weight, contraction ordered (ky,kx,cin)
    # alpha_ref:         (1,) in SMEM    shared PReLU slope
    # o_ref:             (1, Cout, TH*W) lane-dense conv+PReLU output tile
    # slab_ref:          (Cin, (TH+2)*W + 2) halo slab (+1 pad lane each end)
    # col_ref:           (9*Cin, TH*W)   im2col staging for the deep matmul
    Cin = cur_ref.shape[1]
    THW = TH * W
    LS = (TH + 2) * W                       # inner slab lanes
    dt = slab_ref.dtype
    t = pl.program_id(1)
    T = pl.num_programs(1)

    # ---- assemble the halo slab: [pad | row above | tile rows | row below | pad]
    slab_ref[:, 0:1] = jnp.zeros((Cin, 1), dt)
    slab_ref[:, 1 + LS:] = jnp.zeros((Cin, 1), dt)
    slab_ref[:, 1:1 + W] = prev_ref[0, :, THW - W:]          # global row t*TH-1
    slab_ref[:, 1 + W:1 + W + THW] = cur_ref[0]              # tile rows
    slab_ref[:, 1 + W + THW:1 + LS] = next_ref[0, :, :W]     # global row t*TH+TH

    # Conv zero padding in H: halo rows of the two boundary tiles are zero.
    @pl.when(t == 0)
    def _():
        slab_ref[:, 1:1 + W] = jnp.zeros((Cin, W), dt)

    @pl.when(t == T - 1)
    def _():
        slab_ref[:, 1 + W + THW:1 + LS] = jnp.zeros((Cin, W), dt)

    slab = slab_ref[...]                                      # (Cin, LS+2)

    # ---- column-shifted slab variants; conv zero padding in W as two masks
    col_idx = lax.broadcasted_iota(jnp.int32, (1, LS), 1) % W
    zero = jnp.zeros((), dt)
    center = slab[:, 1:1 + LS]                                # x[., w]
    left = jnp.where(col_idx > 0, slab[:, 0:LS], zero)        # x[., w-1]
    right = jnp.where(col_idx < W - 1, slab[:, 2:2 + LS], zero)   # x[., w+1]
    variants = (left, center, right)                          # kx = 0, 1, 2

    # ---- stage the 9 taps into the im2col scratch (tap-major, then cin)
    for ky in range(3):
        for kx in range(3):
            k = ky * 3 + kx
            col_ref[k * Cin:(k + 1) * Cin, :] = variants[kx][:, ky * W:ky * W + THW]

    # ---- single deep MXU matmul (depth 9*Cin) + fused PReLU epilogue
    acc = jnp.dot(w_ref[...], col_ref[...], preferred_element_type=jnp.float32)
    alpha = alpha_ref[0]
    out = jnp.where(acc >= 0, acc, alpha * acc)               # shared-alpha PReLU
    o_ref[0] = out.astype(o_ref.dtype)


def _vmem_budget_and_limit():
    """Generation-aware scoped-VMEM limit and tiling budget."""
    phys = 64 << 20                      # conservative default (v7x per-core)
    try:
        info = pltpu.get_tpu_info()
        phys = int(getattr(info, "vmem_capacity_bytes", phys)) or phys
    except Exception:
        pass
    limit = (96 << 20) if phys >= (128 << 20) else (48 << 20)
    return int(limit * 0.65), limit


def _pick_row_tile(H, W, Cin, Cout, cbytes, obytes, budget):
    """Largest TH with TH | H, TH*W % 128 == 0 (lane-dense stores) and an
    estimate of the real per-step VMEM under `budget`; prefer >= 2 tiles per
    image so the pipeline overlaps and both v7x TensorCores get work."""

    def est(th):
        thw = th * W
        ls = (th + 2) * W + 2
        inp = 3 * 2 * Cin * thw * cbytes          # prev/cur/next, double-buffered
        wgt = 2 * Cout * 9 * Cin * cbytes
        outb = 2 * Cout * thw * obytes
        slab = Cin * ls * cbytes
        im2c = 9 * Cin * thw * cbytes
        vari = 3 * Cin * ls * cbytes              # left/center/right temporaries
        acc = 2 * Cout * thw * 4                  # f32 matmul result + PReLU temp
        return inp + wgt + outb + slab + im2c + vari + acc

    divisors = [th for th in range(1, H + 1) if H % th == 0]
    aligned = [th for th in divisors if (th * W) % 128 == 0]
    pool = aligned if aligned else divisors       # fallback: masked stores, but runs
    fits = [th for th in pool if est(th) <= budget]
    if not fits:
        return min(pool)                          # nothing fits: smallest tile
    multi = [th for th in fits if H // th >= 2]
    return max(multi) if multi else max(fits)


def upsample_block(x_nchw, w_hwio, alpha, up_scale, *,
                   compute_dtype=jnp.bfloat16):
    """Forward pass of UpsampleBLock.

    x_nchw : [N, Cin, H, W]        (PyTorch layout)
    w_hwio : [3, 3, Cin, Cin*r*r]  conv weight (HWIO, no bias)
    alpha  : scalar PReLU slope (nn.PReLU(): one shared parameter)
    returns: [N, Cin, H*r, W*r]    (PyTorch layout, same dtype as x)
    """
    N, Cin, H, W = x_nchw.shape
    r = int(up_scale)
    Cout = Cin * r * r
    assert w_hwio.shape == (3, 3, Cin, Cout)

    # Pad channels to a multiple of 8 so all scratch stores are sublane-aligned
    # (no-op for production Cin=64; only matters for tiny test channels).
    cin_p = -(-Cin // 8) * 8
    if cin_p != Cin:
        x_p = jnp.pad(x_nchw, ((0, 0), (0, cin_p - Cin), (0, 0), (0, 0)))
        w_p = jnp.pad(w_hwio, ((0, 0), (0, 0), (0, cin_p - Cin), (0, 0)))
    else:
        x_p, w_p = x_nchw, w_hwio

    cbytes = np.dtype(compute_dtype).itemsize
    obytes = x_nchw.dtype.itemsize
    budget, vmem_limit = _vmem_budget_and_limit()
    TH = _pick_row_tile(H, W, cin_p, Cout, cbytes, obytes, budget)
    T = H // TH
    THW = TH * W

    # Free reshape (merges trailing dims): stays in PyTorch's NCHW layout.
    x_flat = x_p.reshape(N, cin_p, H * W).astype(compute_dtype)
    # Weight as (Cout, 9*Cin) with contraction ordered (ky, kx, cin).
    w_r = jnp.transpose(w_p, (3, 0, 1, 2)).reshape(Cout, 9 * cin_p)
    w_r = w_r.astype(compute_dtype)
    alpha_arr = jnp.full((1,), alpha, dtype=jnp.float32)

    kernel = functools.partial(_conv3x3_prelu_kernel, W=W, TH=TH)
    row_block = lambda idx_fn: pl.BlockSpec((1, cin_p, THW), idx_fn)

    conv = pl.pallas_call(
        kernel,
        out_shape=jax.ShapeDtypeStruct((N, Cout, H * W), x_nchw.dtype),
        grid_spec=pltpu.PrefetchScalarGridSpec(
            num_scalar_prefetch=0,
            grid=(N, T),
            in_specs=[
                row_block(lambda n, t: (n, 0, jnp.maximum(t - 1, 0))),      # halo above
                row_block(lambda n, t: (n, 0, t)),                          # tile rows
                row_block(lambda n, t: (n, 0, jnp.minimum(t + 1, T - 1))),  # halo below
                pl.BlockSpec((Cout, 9 * cin_p), lambda n, t: (0, 0)),       # weights (resident)
                pl.BlockSpec(memory_space=pltpu.MemorySpace.SMEM),          # alpha scalar
            ],
            out_specs=pl.BlockSpec((1, Cout, THW), lambda n, t: (n, 0, t)),
            scratch_shapes=[
                pltpu.VMEM((cin_p, (TH + 2) * W + 2), compute_dtype),  # halo slab
                pltpu.VMEM((9 * cin_p, THW), compute_dtype),           # im2col
            ],
        ),
        compiler_params=pltpu.CompilerParams(
            dimension_semantics=("parallel", "parallel"),
            vmem_limit_bytes=vmem_limit),
    )(x_flat, x_flat, x_flat, w_r, alpha_arr)

    # PixelShuffle (PyTorch semantics) as pure layout on the NCHW conv output:
    #   y[n, c, h*r+i, w*r+j] = conv[n, c*r*r + i*r + j, h*W + w]
    # TODO(synk): fuse this permutation with the consumer stage to avoid the
    # extra HBM round trip of the conv output.
    y = conv.reshape(N, Cin, r, r, H, W)
    y = jnp.transpose(y, (0, 1, 4, 2, 5, 3))      # (N, Cin, H, r, W, r)
    return y.reshape(N, Cin, H * r, W * r)


def _reference(x_nchw, w_hwio, alpha, up_scale):
    """Pure-JAX reference (lax conv) for correctness checking."""
    N, Cin, H, W = x_nchw.shape
    r = up_scale
    x_nhwc = jnp.transpose(x_nchw, (0, 2, 3, 1))
    conv = lax.conv_general_dilated(
        x_nhwc, w_hwio, window_strides=(1, 1), padding="SAME",
        dimension_numbers=("NHWC", "HWIO", "NHWC"))
    conv = jnp.where(conv >= 0, conv, alpha * conv)
    y = conv.reshape(N, H, W, Cin, r, r)
    y = jnp.transpose(y, (0, 3, 1, 4, 2, 5)).reshape(N, Cin, H * r, W * r)
    return y


if __name__ == "__main__":
    # Small shapes consistent with the module: in_channels=4, up_scale=2.
    N, Cin, H, W = 2, 4, 16, 16
    up_scale = 2
    Cout = Cin * up_scale ** 2

    key = jax.random.PRNGKey(0)
    k_x, k_w = jax.random.split(key)
    x = jax.random.normal(k_x, (N, Cin, H, W), dtype=jnp.float32)
    w = jax.random.normal(k_w, (3, 3, Cin, Cout), dtype=jnp.float32) * 0.1
    alpha = 0.25   # nn.PReLU() default init

    ref = jax.block_until_ready(_reference(x, w, alpha, up_scale))

    # f32 MXU operands: tight check against the lax reference.
    out_f32 = jax.block_until_ready(
        upsample_block(x, w, alpha, up_scale, compute_dtype=jnp.float32))
    assert out_f32.shape == (N, Cin, H * up_scale, W * up_scale), out_f32.shape
    np.testing.assert_allclose(np.asarray(out_f32), np.asarray(ref),
                               rtol=2e-3, atol=2e-3)

    # bf16 MXU operands (default perf path on v6e/v7x), f32 accumulation.
    out_bf16 = jax.block_until_ready(
        upsample_block(x, w, alpha, up_scale, compute_dtype=jnp.bfloat16))
    np.testing.assert_allclose(np.asarray(out_bf16), np.asarray(ref),
                               rtol=5e-2, atol=5e-2)

    print("KERNEL_OK")
</pallas_src>

<mosaic_0001>
module attributes {stable_mosaic.version = 11 : i64} {
  func.func @_conv3x3_prelu_kernel(%arg0: i32, %arg1: i32, %arg2: memref<1x8x128xf32, #tpu.memory_space<vmem>>, %arg3: memref<1x8x128xf32, #tpu.memory_space<vmem>>, %arg4: memref<1x8x128xf32, #tpu.memory_space<vmem>>, %arg5: memref<16x72xf32, #tpu.memory_space<vmem>>, %arg6: memref<1xf32, #tpu.memory_space<smem>>, %arg7: memref<1x16x128xf32, #tpu.memory_space<vmem>>, %arg8: memref<8x162xf32, #tpu.memory_space<vmem>>, %arg9: memref<72x128xf32, #tpu.memory_space<vmem>>) attributes {dimension_semantics = [#tpu.dimension_semantics<parallel>, #tpu.dimension_semantics<parallel>], iteration_bounds = array<i64: 2, 2>, scalar_prefetch = 0 : i64, scratch_operands = 2 : i64, tpu.core_type = #tpu.core_type<tc>, window_params = [{transform_indices = @transform_0, window_bounds = array<i64: 1, 8, 128>}, {transform_indices = @transform_1, window_bounds = array<i64: 1, 8, 128>}, {transform_indices = @transform_2, window_bounds = array<i64: 1, 8, 128>}, {pipeline_mode = #tpu.pipeline_mode<synchronous>, transform_indices = @transform_3, window_bounds = array<i64: 16, 72>}, {transform_indices = @transform_4, window_bounds = array<i64: 1>}, {transform_indices = @transform_5, window_bounds = array<i64: 1, 16, 128>}]} {
    %cst = arith.constant 0.000000e+00 : f32
    %0 = vector.broadcast %cst : f32 to vector<8x1xf32>
    %c0 = arith.constant 0 : index
    %c0_0 = arith.constant 0 : index
    %1 = vector.load %arg8[%c0, %c0_0] : memref<8x162xf32, #tpu.memory_space<vmem>>, vector<8x1xf32>
    tpu.vector_store %arg8[%c0, %c0_0], %0 {strides = array<i32>} : memref<8x162xf32, #tpu.memory_space<vmem>>, vector<8x1xf32>,
    %cst_1 = arith.constant 0.000000e+00 : f32
    %2 = vector.broadcast %cst_1 : f32 to vector<8x1xf32>
    %c0_2 = arith.constant 0 : index
    %c161 = arith.constant 161 : index
    %3 = vector.load %arg8[%c0_2, %c161] : memref<8x162xf32, #tpu.memory_space<vmem>>, vector<8x1xf32>
    tpu.vector_store %arg8[%c0_2, %c161], %2 {strides = array<i32>} : memref<8x162xf32, #tpu.memory_space<vmem>>, vector<8x1xf32>,
    %c0_3 = arith.constant 0 : index
    %c0_4 = arith.constant 0 : index
    %c112 = arith.constant 112 : index
    %4 = vector.load %arg2[%c0_3, %c0_4, %c112] : memref<1x8x128xf32, #tpu.memory_space<vmem>>, vector<1x8x16xf32>
    %5 = vector.shape_cast %4 : vector<1x8x16xf32> to vector<8x16xf32>
    %c0_5 = arith.constant 0 : index
    %c1 = arith.constant 1 : index
    %6 = vector.load %arg8[%c0_5, %c1] : memref<8x162xf32, #tpu.memory_space<vmem>>, vector<8x16xf32>
    tpu.vector_store %arg8[%c0_5, %c1], %5 {strides = array<i32>} : memref<8x162xf32, #tpu.memory_space<vmem>>, vector<8x16xf32>,
    %c0_6 = arith.constant 0 : index
    %c0_7 = arith.constant 0 : index
    %c0_8 = arith.constant 0 : index
    %7 = vector.load %arg3[%c0_6, %c0_7, %c0_8] : memref<1x8x128xf32, #tpu.memory_space<vmem>>, vector<1x8x128xf32>
    %8 = vector.shape_cast %7 : vector<1x8x128xf32> to vector<8x128xf32>
    %c0_9 = arith.constant 0 : index
    %c17 = arith.constant 17 : index
    %9 = vector.load %arg8[%c0_9, %c17] : memref<8x162xf32, #tpu.memory_space<vmem>>, vector<8x128xf32>
    tpu.vector_store %arg8[%c0_9, %c17], %8 {strides = array<i32>} : memref<8x162xf32, #tpu.memory_space<vmem>>, vector<8x128xf32>,
    %c0_10 = arith.constant 0 : index
    %c0_11 = arith.constant 0 : index
    %c0_12 = arith.constant 0 : index
    %10 = vector.load %arg4[%c0_10, %c0_11, %c0_12] : memref<1x8x128xf32, #tpu.memory_space<vmem>>, vector<1x8x16xf32>
    %11 = vector.shape_cast %10 : vector<1x8x16xf32> to vector<8x16xf32>
    %c0_13 = arith.constant 0 : index
    %c145 = arith.constant 145 : index
    %12 = vector.load %arg8[%c0_13, %c145] : memref<8x162xf32, #tpu.memory_space<vmem>>, vector<8x16xf32>
    tpu.vector_store %arg8[%c0_13, %c145], %11 {strides = array<i32>} : memref<8x162xf32, #tpu.memory_space<vmem>>, vector<8x16xf32>,
    %c0_i32 = arith.constant 0 : i32
    %13 = arith.cmpi eq, %arg1, %c0_i32 : i32
    %14 = arith.extui %13 : i1 to i32
    %c0_i32_14 = arith.constant 0 : i32
    %15 = arith.cmpi ne, %14, %c0_i32_14 : i32
    scf.if %15 {
      %cst_46 = arith.constant 0.000000e+00 : f32
      %82 = vector.broadcast %cst_46 : f32 to vector<8x16xf32>
      %c0_47 = arith.constant 0 : index
      %c1_48 = arith.constant 1 : index
      %83 = vector.load %arg8[%c0_47, %c1_48] : memref<8x162xf32, #tpu.memory_space<vmem>>, vector<8x16xf32>
      tpu.vector_store %arg8[%c0_47, %c1_48], %82 {strides = array<i32>} : memref<8x162xf32, #tpu.memory_space<vmem>>, vector<8x16xf32>,
    } else {
    }
    %c1_i32 = arith.constant 1 : i32
    %16 = arith.cmpi eq, %arg1, %c1_i32 : i32
    %17 = arith.extui %16 : i1 to i32
    %c0_i32_15 = arith.constant 0 : i32
    %18 = arith.cmpi ne, %17, %c0_i32_15 : i32
    scf.if %18 {
      %cst_46 = arith.constant 0.000000e+00 : f32
      %82 = vector.broadcast %cst_46 : f32 to vector<8x16xf32>
      %c0_47 = arith.constant 0 : index
      %c145_48 = arith.constant 145 : index
      %83 = vector.load %arg8[%c0_47, %c145_48] : memref<8x162xf32, #tpu.memory_space<vmem>>, vector<8x16xf32>
      tpu.vector_store %arg8[%c0_47, %c145_48], %82 {strides = array<i32>} : memref<8x162xf32, #tpu.memory_space<vmem>>, vector<8x16xf32>,
    } else {
    }
    %c0_16 = arith.constant 0 : index
    %c0_17 = arith.constant 0 : index
    %19 = vector.load %arg8[%c0_16, %c0_17] : memref<8x162xf32, #tpu.memory_space<vmem>>, vector<8x162xf32>
    %20 = tpu.iota {dimensions = array<i32: 1>} : vector<1x160xi32>
    %c16_i32 = arith.constant 16 : i32
    %c0_i32_18 = arith.constant 0 : i32
    %21 = arith.cmpi eq, %c16_i32, %c0_i32_18 : i32
    %c1_i32_19 = arith.constant 1 : i32
    %22 = arith.select %21, %c1_i32_19, %c16_i32 : i32
    %23 = vector.broadcast %22 : i32 to vector<1x160xi32>
    %24 = arith.remsi %20, %23 : vector<1x160xi32>
    %c0_i32_20 = arith.constant 0 : i32
    %25 = vector.broadcast %c0_i32_20 : i32 to vector<1x160xi32>
    %26 = arith.cmpi ne, %24, %25 : vector<1x160xi32>
    %c0_i32_21 = arith.constant 0 : i32
    %27 = vector.broadcast %c0_i32_21 : i32 to vector<1x160xi32>
    %28 = arith.cmpi slt, %24, %27 : vector<1x160xi32>
    %c0_i32_22 = arith.constant 0 : i32
    %29 = arith.cmpi slt, %22, %c0_i32_22 : i32
    %30 = vector.broadcast %29 : i1 to vector<1x160xi1>
    %31 = vector.broadcast %30 : vector<1x160xi1> to vector<1x160xi1>
    %32 = arith.xori %28, %31 : vector<1x160xi1>
    %33 = arith.andi %32, %26 : vector<1x160xi1>
    %34 = vector.broadcast %22 : i32 to vector<1x160xi32>
    %35 = arith.addi %24, %34 : vector<1x160xi32>
    %36 = arith.select %33, %35, %24 : vector<1x160xi1>, vector<1x160xi32>
    %37 = vector.extract_strided_slice %19 {offsets = [0, 1], sizes = [8, 160], strides = [1, 1]} : vector<8x162xf32> to vector<8x160xf32>
    %c0_i32_23 = arith.constant 0 : i32
    %38 = vector.broadcast %c0_i32_23 : i32 to vector<1x160xi32>
    %39 = arith.cmpi sgt, %36, %38 : vector<1x160xi32>
    %40 = vector.extract_strided_slice %19 {offsets = [0, 0], sizes = [8, 160], strides = [1, 1]} : vector<8x162xf32> to vector<8x160xf32>
    %cst_24 = arith.constant 0.000000e+00 : f32
    %41 = vector.shape_cast %39 : vector<1x160xi1> to vector<1x160xi1>
    %42 = vector.broadcast %41 : vector<1x160xi1> to vector<8x160xi1>
    %43 = vector.broadcast %cst_24 : f32 to vector<8x160xf32>
    %44 = arith.select %42, %40, %43 : vector<8x160xi1>, vector<8x160xf32>
    %c15_i32 = arith.constant 15 : i32
    %45 = vector.broadcast %c15_i32 : i32 to vector<1x160xi32>
    %46 = arith.cmpi slt, %36, %45 : vector<1x160xi32>
    %47 = vector.extract_strided_slice %19 {offsets = [0, 2], sizes = [8, 160], strides = [1, 1]} : vector<8x162xf32> to vector<8x160xf32>
    %cst_25 = arith.constant 0.000000e+00 : f32
    %48 = vector.shape_cast %46 : vector<1x160xi1> to vector<1x160xi1>
    %49 = vector.broadcast %48 : vector<1x160xi1> to vector<8x160xi1>
    %50 = vector.broadcast %cst_25 : f32 to vector<8x160xf32>
    %51 = arith.select %49, %47, %50 : vector<8x160xi1>, vector<8x160xf32>
    %52 = vector.extract_strided_slice %44 {offsets = [0, 0], sizes = [8, 128], strides = [1, 1]} : vector<8x160xf32> to vector<8x128xf32>
    %c0_26 = arith.constant 0 : index
    %c0_27 = arith.constant 0 : index
    %53 = vector.load %arg9[%c0_26, %c0_27] : memref<72x128xf32, #tpu.memory_space<vmem>>, vector<8x128xf32>
    tpu.vector_store %arg9[%c0_26, %c0_27], %52 {strides = array<i32>} : memref<72x128xf32, #tpu.memory_space<vmem>>, vector<8x128xf32>,
    %54 = vector.extract_strided_slice %37 {offsets = [0, 0], sizes = [8, 128], strides = [1, 1]} : vector<8x160xf32> to vector<8x128xf32>
    %c8 = arith.constant 8 : index
    %c0_28 = arith.constant 0 : index
    %55 = vector.load %arg9[%c8, %c0_28] : memref<72x128xf32, #tpu.memory_space<vmem>>, vector<8x128xf32>
    tpu.vector_store %arg9[%c8, %c0_28], %54 {strides = array<i32>} : memref<72x128xf32, #tpu.memory_space<vmem>>, vector<8x128xf32>,
    %56 = vector.extract_strided_slice %51 {offsets = [0, 0], sizes = [8, 128], strides = [1, 1]} : vector<8x160xf32> to vector<8x128xf32>
    %c16 = arith.constant 16 : index
    %c0_29 = arith.constant 0 : index
    %57 = vector.load %arg9[%c16, %c0_29] : memref<72x128xf32, #tpu.memory_space<vmem>>, vector<8x128xf32>
    tpu.vector_store %arg9[%c16, %c0_29], %56 {strides = array<i32>} : memref<72x128xf32, #tpu.memory_space<vmem>>, vector<8x128xf32>,
    %58 = vector.extract_strided_slice %44 {offsets = [0, 16], sizes = [8, 128], strides = [1, 1]} : vector<8x160xf32> to vector<8x128xf32>
    %c24 = arith.constant 24 : index
    %c0_30 = arith.constant 0 : index
    %59 = vector.load %arg9[%c24, %c0_30] : memref<72x128xf32, #tpu.memory_space<vmem>>, vector<8x128xf32>
    tpu.vector_store %arg9[%c24, %c0_30], %58 {strides = array<i32>} : memref<72x128xf32, #tpu.memory_space<vmem>>, vector<8x128xf32>,
    %60 = vector.extract_strided_slice %37 {offsets = [0, 16], sizes = [8, 128], strides = [1, 1]} : vector<8x160xf32> to vector<8x128xf32>
    %c32 = arith.constant 32 : index
    %c0_31 = arith.constant 0 : index
    %61 = vector.load %arg9[%c32, %c0_31] : memref<72x128xf32, #tpu.memory_space<vmem>>, vector<8x128xf32>
    tpu.vector_store %arg9[%c32, %c0_31], %60 {strides = array<i32>} : memref<72x128xf32, #tpu.memory_space<vmem>>, vector<8x128xf32>,
    %62 = vector.extract_strided_slice %51 {offsets = [0, 16], sizes = [8, 128], strides = [1, 1]} : vector<8x160xf32> to vector<8x128xf32>
    %c40 = arith.constant 40 : index
    %c0_32 = arith.constant 0 : index
    %63 = vector.load %arg9[%c40, %c0_32] : memref<72x128xf32, #tpu.memory_space<vmem>>, vector<8x128xf32>
    tpu.vector_store %arg9[%c40, %c0_32], %62 {strides = array<i32>} : memref<72x128xf32, #tpu.memory_space<vmem>>, vector<8x128xf32>,
    %64 = vector.extract_strided_slice %44 {offsets = [0, 32], sizes = [8, 128], strides = [1, 1]} : vector<8x160xf32> to vector<8x128xf32>
    %c48 = arith.constant 48 : index
    %c0_33 = arith.constant 0 : index
    %65 = vector.load %arg9[%c48, %c0_33] : memref<72x128xf32, #tpu.memory_space<vmem>>, vector<8x128xf32>
    tpu.vector_store %arg9[%c48, %c0_33], %64 {strides = array<i32>} : memref<72x128xf32, #tpu.memory_space<vmem>>, vector<8x128xf32>,
    %66 = vector.extract_strided_slice %37 {offsets = [0, 32], sizes = [8, 128], strides = [1, 1]} : vector<8x160xf32> to vector<8x128xf32>
    %c56 = arith.constant 56 : index
    %c0_34 = arith.constant 0 : index
    %67 = vector.load %arg9[%c56, %c0_34] : memref<72x128xf32, #tpu.memory_space<vmem>>, vector<8x128xf32>
    tpu.vector_store %arg9[%c56, %c0_34], %66 {strides = array<i32>} : memref<72x128xf32, #tpu.memory_space<vmem>>, vector<8x128xf32>,
    %68 = vector.extract_strided_slice %51 {offsets = [0, 32], sizes = [8, 128], strides = [1, 1]} : vector<8x160xf32> to vector<8x128xf32>
    %c64 = arith.constant 64 : index
    %c0_35 = arith.constant 0 : index
    %69 = vector.load %arg9[%c64, %c0_35] : memref<72x128xf32, #tpu.memory_space<vmem>>, vector<8x128xf32>
    tpu.vector_store %arg9[%c64, %c0_35], %68 {strides = array<i32>} : memref<72x128xf32, #tpu.memory_space<vmem>>, vector<8x128xf32>,
    %c0_36 = arith.constant 0 : index
    %c0_37 = arith.constant 0 : index
    %70 = vector.load %arg5[%c0_36, %c0_37] : memref<16x72xf32, #tpu.memory_space<vmem>>, vector<16x72xf32>
    %c0_38 = arith.constant 0 : index
    %c0_39 = arith.constant 0 : index
    %71 = vector.load %arg9[%c0_38, %c0_39] : memref<72x128xf32, #tpu.memory_space<vmem>>, vector<72x128xf32>
    %cst_40 = arith.constant dense<0.000000e+00> : vector<16x128xf32>
    %72 = tpu.matmul %70, %71, %cst_40 {dimension_numbers = #tpu.dot_dimension_numbers<[1], [0], [0], [1], [0, 0, 1, 1], [], []>} : vector<16x72xf32>, vector<72x128xf32>, vector<16x128xf32> -> vector<16x128xf32>
    %c0_41 = arith.constant 0 : index
    %73 = memref.load %arg6[%c0_41] : memref<1xf32, #tpu.memory_space<smem>>
    %cst_42 = arith.constant 0.000000e+00 : f32
    %74 = vector.broadcast %cst_42 : f32 to vector<16x128xf32>
    %75 = arith.cmpf oge, %72, %74 : vector<16x128xf32>
    %76 = vector.broadcast %73 : f32 to vector<16x128xf32>
    %77 = arith.mulf %76, %72 : vector<16x128xf32>
    %78 = arith.select %75, %72, %77 : vector<16x128xi1>, vector<16x128xf32>
    %c0_43 = arith.constant 0 : index
    %c0_44 = arith.constant 0 : index
    %c0_45 = arith.constant 0 : index
    %79 = vector.load %arg7[%c0_43, %c0_44, %c0_45] : memref<1x16x128xf32, #tpu.memory_space<vmem>>, vector<1x16x128xf32>
    %80 = vector.shape_cast %79 : vector<1x16x128xf32> to vector<16x128xf32>
    %81 = vector.shape_cast %78 : vector<16x128xf32> to vector<1x16x128xf32>
    tpu.vector_store %arg7[%c0_43, %c0_44, %c0_45], %81 {strides = array<i32>} : memref<1x16x128xf32, #tpu.memory_space<vmem>>, vector<1x16x128xf32>,
    return
  }
  func.func @transform_0(%arg0: i32, %arg1: i32) -> (i32, i32, i32) {
    %c1_i32 = arith.constant 1 : i32
    %0 = arith.subi %arg1, %c1_i32 : i32
    %c0_i32 = arith.constant 0 : i32
    %1 = arith.maxsi %0, %c0_i32 : i32
    %c0_i32_0 = arith.constant 0 : i32
    %c0_i32_1 = arith.constant 0 : i32
    return %arg0, %c0_i32_0, %1 : i32, i32, i32
  }
  func.func @transform_1(%arg0: i32, %arg1: i32) -> (i32, i32, i32) {
    %c0_i32 = arith.constant 0 : i32
    %c0_i32_0 = arith.constant 0 : i32
    return %arg0, %c0_i32, %arg1 : i32, i32, i32
  }
  func.func @transform_2(%arg0: i32, %arg1: i32) -> (i32, i32, i32) {
    %c1_i32 = arith.constant 1 : i32
    %0 = arith.addi %arg1, %c1_i32 : i32
    %c1_i32_0 = arith.constant 1 : i32
    %1 = arith.minsi %0, %c1_i32_0 : i32
    %c0_i32 = arith.constant 0 : i32
    %c0_i32_1 = arith.constant 0 : i32
    return %arg0, %c0_i32, %1 : i32, i32, i32
  }
  func.func @transform_3(%arg0: i32, %arg1: i32) -> (i32, i32) {
    %c0_i32 = arith.constant 0 : i32
    %c0_i32_0 = arith.constant 0 : i32
    %c0_i32_1 = arith.constant 0 : i32
    return %c0_i32, %c0_i32_0 : i32, i32
  }
  func.func @transform_4(%arg0: i32, %arg1: i32) -> i32 {
    %c0_i32 = arith.constant 0 : i32
    %c0_i32_0 = arith.constant 0 : i32
    return %c0_i32 : i32
  }
  func.func @transform_5(%arg0: i32, %arg1: i32) -> (i32, i32, i32) {
    %c0_i32 = arith.constant 0 : i32
    %c0_i32_0 = arith.constant 0 : i32
    return %arg0, %c0_i32, %arg1 : i32, i32, i32
  }
}

</mosaic_0001>

<llo_original>
// kernel: tpu_custom_call.1
$region0: #{tpu_custom_call.1}
  #allocation0 [shape = 'u32[]', space=smem, size = 0x4, offset = 0x4, fixed_abs, tag = 'smem constant byte address 0x4 - core index']
  #allocation1 [shape = 'u32[144,128]{1,0:T(1,128)}', space=vmem, size = 0x12000, scoped, tag = 'internal scratch']
  #allocation2 [shape = 'f32[8,162]{1,0:T(8,128)}', space=vmem, size = 0x2000, scoped, tag = 'scratch operand']
  #allocation3 [shape = 'f32[72,128]{1,0:T(8,128)}', space=vmem, size = 0x9000, scoped, tag = 'scratch operand']
  #allocation4 [shape = 'f32[1]{0:T(128)S(6)}', space=smem, size = 0x200, scoped, tag = 'scoped memory for tpu_custom_call.1']
  %s0 = inlined_call_operand.hbm [shape: f32[2,8,256], index: 0, kind: input, shape index: {}]
  %s1 = inlined_call_operand.hbm [shape: f32[2,8,256], index: 1, kind: input, shape index: {}]
  %s2 = inlined_call_operand.hbm [shape: f32[2,8,256], index: 2, kind: input, shape index: {}]
  %s3 = inlined_call_operand.hbm [shape: f32[16,72], index: 3, kind: input, shape index: {}]
  %s4 = inlined_call_operand.<no memory space> [shape: f32[1], index: 4, kind: input, shape index: {}]
  %s5 = inlined_call_operand.hbm [shape: f32[2,16,256], index: 5, kind: output, shape index: {}]
  %s6 = sld [smem:[#allocation0]]
  $region77: #{tpu_custom_call.1} parent=0
    _
  %s8 = ssub.s32 1, %s6
  %s9 = scalar_select 0, %s8, %s6
  %10 = sst [smem:[#allocation4]] %s4
  $region1: #{tpu_custom_call.1} parent=0
    #allocation5 [shape = 'u8[8192]{0}', space=vmem, size = 0x2000, scoped, tag = 'input window, operand 0']
    #allocation6 [shape = 's32[2]{0}', space=sflag, size = 0x8, scoped, tag = 'scoped memory for tpu_custom_call.1']
    #allocation7 [shape = 's32[2]{0}', space=sflag, size = 0x8, scoped, tag = 'scoped memory for tpu_custom_call.1']
    #allocation8 [shape = 'u8[8192]{0}', space=vmem, size = 0x2000, scoped, tag = 'input window, operand 1']
    #allocation9 [shape = 's32[2]{0}', space=sflag, size = 0x8, scoped, tag = 'scoped memory for tpu_custom_call.1']
    #allocation10 [shape = 'u8[8192]{0}', space=vmem, size = 0x2000, scoped, tag = 'input window, operand 2']
    #allocation11 [shape = 'u8[8192]{0}', space=vmem, size = 0x2000, scoped, tag = 'input window, operand 3, single buffered']
    #allocation12 [shape = 's32[1]{0}', space=sflag, size = 0x4, scoped, tag = 'scoped memory for tpu_custom_call.1']
    #allocation13 [shape = 'u8[16384]{0}', space=vmem, size = 0x4000, scoped, tag = 'output window, operand 0']
    %11 = vsyncpa [#allocation6], 0
    %s12 = scalar_lea.sflag [#allocation6], 1
    %13 = vsyncpa %s12, 0
    %14 = vsyncpa [#allocation9], 0
    %s15 = scalar_lea.sflag [#allocation9], 1
    %16 = vsyncpa %s15, 0
    %17 = vsyncpa [#allocation12], 0
    %18 = vsyncpa [#allocation7], 0
    %s19 = scalar_lea.sflag [#allocation7], 1
    %20 = vsyncpa %s19, 0
    loop: start=0, step=1, limit=6
    $region2: #{tpu_custom_call.1} parent=1 // loop_pre_header
      _
    $region3: #{tpu_custom_call.1} parent=1 // loop_header
      %s22 = sphi 0, %s26
      %p23 = scmp.ge.s32.totalorder %s22, 6
      %s29 = sphi 0, %s41
      %s30 = sphi 0, %s37
      %s31 = sphi 0, %s29
      %s32 = sphi 0, %s30
      %s33 = sphi 0, %s31
      %s34 = sphi 0, %s32
      %s52 = sphi 0, %s54
      %s55 = sphi 0, %s52
      %s56 = sphi 0, %s55
      %s72 = sphi 0, %s56
      %s80 = sphi 0, %s82
      %s83 = sphi 0, %s80
      %s84 = sphi 0, %s83
      %s100 = sphi 0, %s84
      %s114 = sphi 0, %s116
      %s117 = sphi 0, %s114
      %s118 = sphi 0, %s117
      %s134 = sphi 0, %s118
      %s138 = sphi 0, %s138
      %s140 = sphi 0, %s138
      %s141 = sphi 0, %s140
      %s155 = sphi 0, %s141
      %s159 = sphi 0, %s159
      %s161 = sphi 0, %s159
      %s162 = sphi 0, %s161
      %s176 = sphi 0, %s162
      %s184 = sphi 0, %s186
      %s187 = sphi 0, %s184
      %s188 = sphi 0, %s187
      %s204 = sphi 0, %s188
    $region4: #{tpu_custom_call.1} parent=1 // loop_header_branch
      %25 = sbr.rel (%p23) target = $region8
    $region5: #{tpu_custom_call.1} parent=1 // loop_body
      %s27 = ssub.s32 %s22, 1
      %s28 = ssub.s32 %s22, 2
      %s35 = sadd.s32 1, %s30
      %p36 = scmp.ge.s32.totalorder %s35, 2
      %s37 = scalar_select %p36, 0, %s35
      %s38 = sadd.s32 1, %s29
      %s39 = scalar_select %p36, %s38, %s29
      %p40 = scmp.ge.s32.totalorder %s39, 2
      %s41 = scalar_select %p40, 0, %s39
      %s42 = ssub.s32 %s30, 1
      %p43 = scmp.gt.s32.totalorder %s42, 0
      %s44 = scalar_select %p43, %s42, 0
      %s45 = ssub.s32 %s37, 1
      %p46 = scmp.gt.s32.totalorder %s45, 0
      %s47 = scalar_select %p46, %s45, 0
      %s48 = ssub.s32 %s29, %s41
      %s49 = ssub.s32 %s44, %s47
      %s50 = sor.u32 %s48, %s49
      %p51 = scmp.eq.s32.totalorder %s50, 0
      %s53 = sadd.s32 %s52, 1
      %s54 = scalar_select %p51, %s52, %s53
      %p57 = pneg %p51
      %p58 = scmp.eq.s32.totalorder %s22, 3
      %p59 = por %p57, %p58
      %p60 = scmp.ne.s32.totalorder %s52, %s55
      %p61 = scmp.eq.s32.totalorder %s22, 0
      %p62 = por %p60, %p61
      %p63 = scmp.ne.s32.totalorder %s52, %s55
      %p64 = scmp.eq.s32.totalorder %s27, 3
      %p65 = por %p63, %p64
      %p66 = scmp.ne.s32.totalorder %s55, %s56
      %p67 = scmp.eq.s32.totalorder %s27, 0
      %p68 = por %p66, %p67
      %p69 = scmp.ne.s32.totalorder %s55, %s56
      %p70 = scmp.eq.s32.totalorder %s28, 3
      %p71 = por %p69, %p70
      %p73 = scmp.ne.s32.totalorder %s56, %s72
      %p74 = scmp.eq.s32.totalorder %s28, 0
      %p75 = por %p73, %p74
      %s76 = ssub.s32 %s29, %s41
      %s77 = ssub.s32 %s30, %s37
      %s78 = sor.u32 %s76, %s77
      %p79 = scmp.eq.s32.totalorder %s78, 0
      %s81 = sadd.s32 %s80, 1
      %s82 = scalar_select %p79, %s80, %s81
      %p85 = pneg %p79
      %p86 = scmp.eq.s32.totalorder %s22, 3
      %p87 = por %p85, %p86
      %p88 = scmp.ne.s32.totalorder %s80, %s83
      %p89 = scmp.eq.s32.totalorder %s22, 0
      %p90 = por %p88, %p89
      %p91 = scmp.ne.s32.totalorder %s80, %s83
      %p92 = scmp.eq.s32.totalorder %s27, 3
      %p93 = por %p91, %p92
      %p94 = scmp.ne.s32.totalorder %s83, %s84
      %p95 = scmp.eq.s32.totalorder %s27, 0
      %p96 = por %p94, %p95
      %p97 = scmp.ne.s32.totalorder %s83, %s84
      %p98 = scmp.eq.s32.totalorder %s28, 3
      %p99 = por %p97, %p98
      %p101 = scmp.ne.s32.totalorder %s84, %s100
      %p102 = scmp.eq.s32.totalorder %s28, 0
      %p103 = por %p101, %p102
      %s104 = sadd.s32 %s30, 1
      %p105 = scmp.lt.s32.totalorder %s104, 1
      %s106 = scalar_select %p105, %s104, 1
      %s107 = sadd.s32 %s37, 1
      %p108 = scmp.lt.s32.totalorder %s107, 1
      %s109 = scalar_select %p108, %s107, 1
      %s110 = ssub.s32 %s29, %s41
      %s111 = ssub.s32 %s106, %s109
      %s112 = sor.u32 %s110, %s111
      %p113 = scmp.eq.s32.totalorder %s112, 0
      %s115 = sadd.s32 %s114, 1
      %s116 = scalar_select %p113, %s114, %s115
      %p119 = pneg %p113
      %p120 = scmp.eq.s32.totalorder %s22, 3
      %p121 = por %p119, %p120
      %p122 = scmp.ne.s32.totalorder %s114, %s117
      %p123 = scmp.eq.s32.totalorder %s22, 0
      %p124 = por %p122, %p123
      %p125 = scmp.ne.s32.totalorder %s114, %s117
      %p126 = scmp.eq.s32.totalorder %s27, 3
      %p127 = por %p125, %p126
      %p128 = scmp.ne.s32.totalorder %s117, %s118
      %p129 = scmp.eq.s32.totalorder %s27, 0
      %p130 = por %p128, %p129
      %p131 = scmp.ne.s32.totalorder %s117, %s118
      %p132 = scmp.eq.s32.totalorder %s28, 3
      %p133 = por %p131, %p132
      %p135 = scmp.ne.s32.totalorder %s118, %s134
      %p136 = scmp.eq.s32.totalorder %s28, 0
      %p137 = por %p135, %p136
      %s139 = sadd.s32 %s138, 1
      %p142 = scmp.eq.s32.totalorder %s22, 3
      %p143 = scmp.ne.s32.totalorder %s138, %s140
      %p144 = scmp.eq.s32.totalorder %s22, 0
      %p145 = por %p143, %p144
      %p146 = scmp.ne.s32.totalorder %s138, %s140
      %p147 = scmp.eq.s32.totalorder %s27, 3
      %p148 = por %p146, %p147
      %p149 = scmp.ne.s32.totalorder %s140, %s141
      %p150 = scmp.eq.s32.totalorder %s27, 0
      %p151 = por %p149, %p150
      %p152 = scmp.ne.s32.totalorder %s140, %s141
      %p153 = scmp.eq.s32.totalorder %s28, 3
      %p154 = por %p152, %p153
      %p156 = scmp.ne.s32.totalorder %s141, %s155
      %p157 = scmp.eq.s32.totalorder %s28, 0
      %p158 = por %p156, %p157
      %s160 = sadd.s32 %s159, 1
      %p163 = scmp.eq.s32.totalorder %s22, 3
      %p164 = scmp.ne.s32.totalorder %s159, %s161
      %p165 = scmp.eq.s32.totalorder %s22, 0
      %p166 = por %p164, %p165
      %p167 = scmp.ne.s32.totalorder %s159, %s161
      %p168 = scmp.eq.s32.totalorder %s27, 3
      %p169 = por %p167, %p168
      %p170 = scmp.ne.s32.totalorder %s161, %s162
      %p171 = scmp.eq.s32.totalorder %s27, 0
      %p172 = por %p170, %p171
      %p173 = scmp.ne.s32.totalorder %s161, %s162
      %p174 = scmp.eq.s32.totalorder %s28, 3
      %p175 = por %p173, %p174
      %p177 = scmp.ne.s32.totalorder %s162, %s176
      %p178 = scmp.eq.s32.totalorder %s28, 0
      %p179 = por %p177, %p178
      %s180 = ssub.s32 %s29, %s41
      %s181 = ssub.s32 %s30, %s37
      %s182 = sor.u32 %s180, %s181
      %p183 = scmp.eq.s32.totalorder %s182, 0
      %s185 = sadd.s32 %s184, 1
      %s186 = scalar_select %p183, %s184, %s185
      %p189 = pneg %p183
      %p190 = scmp.eq.s32.totalorder %s22, 3
      %p191 = por %p189, %p190
      %p192 = scmp.ne.s32.totalorder %s184, %s187
      %p193 = scmp.eq.s32.totalorder %s22, 0
      %p194 = por %p192, %p193
      %p195 = scmp.ne.s32.totalorder %s184, %s187
      %p196 = scmp.eq.s32.totalorder %s27, 3
      %p197 = por %p195, %p196
      %p198 = scmp.ne.s32.totalorder %s187, %s188
      %p199 = scmp.eq.s32.totalorder %s27, 0
      %p200 = por %p198, %p199
      %p201 = scmp.ne.s32.totalorder %s187, %s188
      %p202 = scmp.eq.s32.totalorder %s28, 3
      %p203 = por %p201, %p202
      %p205 = scmp.ne.s32.totalorder %s188, %s204
      %p206 = scmp.eq.s32.totalorder %s28, 0
      %p207 = por %p205, %p206
      %p208 = scmp.le.s32.totalorder 1, %s22
      %p209 = scmp.lt.s32.totalorder %s22, 5
      %p210 = pnand %p208, %p209
      %p211 = pneg %p210
      // Predicated region
      $region9: #{tpu_custom_call.1} parent=5 // pred_check
        _
      $region10: #{tpu_custom_call.1} parent=5 // pred_check_branch
        %213 = sbr.rel (%p210) target = $region12
      $region11: #{tpu_custom_call.1} parent=5 // pred_region
        %s214 = ssub.s32 %s22, 1
        // Predicated region
        $region13: #{tpu_custom_call.1} parent=11 // pred_check
          %p215 = pneg %p151
        $region14: #{tpu_custom_call.1} parent=11 // pred_check_branch
          %217 = sbr.rel (%p215) target = $region16
        $region15: #{tpu_custom_call.1} parent=11 // pred_region
          %s219 = ssub.s32 256, 256
          %220 = vsyncadd [#allocation12], %s219
          %s221 = sshll.u32 [#allocation11], 4
          %s222 = int_to_ptr.vmem [resolvable:$true] %s221
          %227 = dma.hbm_to_vmem [thread:$0]  %s3, 256, %s222, [#allocation12], 128, 128, 8
        $region16: #{tpu_custom_call.1} parent=11 // pred_fallthru
          _
        // Predicated region
        $region17: #{tpu_custom_call.1} parent=11 // pred_check
          %p228 = pneg %p172
        $region18: #{tpu_custom_call.1} parent=11 // pred_check_branch
          %230 = sbr.rel (%p228) target = $region20
        $region19: #{tpu_custom_call.1} parent=11 // pred_region
          _
        $region20: #{tpu_custom_call.1} parent=11 // pred_fallthru
          _
      $region12: #{tpu_custom_call.1} parent=5 // pred_fallthru
        _
      %p231 = scmp.lt.s32.totalorder %s22, 4
      // Predicated region
      $region21: #{tpu_custom_call.1} parent=5 // pred_check
        %p232 = pneg %p231
      $region22: #{tpu_custom_call.1} parent=5 // pred_check_branch
        %234 = sbr.rel (%p232) target = $region24
      $region23: #{tpu_custom_call.1} parent=5 // pred_region
        // Predicated region
        $region25: #{tpu_custom_call.1} parent=23 // pred_check
          %p235 = pneg %p62
        $region26: #{tpu_custom_call.1} parent=23 // pred_check_branch
          %237 = sbr.rel (%p235) target = $region28
        $region27: #{tpu_custom_call.1} parent=23 // pred_region
          %s238 = sand.u32 %s52, 1
          %s239 = scalar_lea.sflag [#allocation6], %s238
          %s240 = sand.u32 %s52, 1
          %s241 = smul.addr %s240, 8
          %s242 = scalar_lea.vmem [#allocation5], %s241
          %s243 = ssub.s32 %s30, 1
          %p244 = scmp.gt.s32.totalorder %s243, 0
          %s245 = scalar_select %p244, %s243, 0
          %s247 = ssub.s32 128, 128
          %248 = vsyncadd %s239, %s247
          %s249 = smul.addr %s29, 2
          %s250 = sadd.s32 %s245, %s249
          %s251 = smul.addr %s250, 128
          %s252 = scalar_lea.hbm %s0, %s251
          %s254 = sshll.u32 %s242, 4
          %s255 = int_to_ptr.vmem [resolvable:$true] %s254
          %257 = dma.hbm_to_vmem [thread:$0]  %s252, 128, %s255, %s239
        $region28: #{tpu_custom_call.1} parent=23 // pred_fallthru
          _
        // Predicated region
        $region29: #{tpu_custom_call.1} parent=23 // pred_check
          %p258 = pneg %p90
        $region30: #{tpu_custom_call.1} parent=23 // pred_check_branch
          %260 = sbr.rel (%p258) target = $region32
        $region31: #{tpu_custom_call.1} parent=23 // pred_region
          %s261 = sand.u32 %s22, 1
          %s262 = scalar_lea.sflag [#allocation9], %s261
          %s263 = sand.u32 %s80, 1
          %s264 = smul.addr %s263, 8
          %s265 = scalar_lea.vmem [#allocation8], %s264
          %s267 = ssub.s32 128, 128
          %268 = vsyncadd %s262, %s267
          %s269 = smul.addr %s29, 2
          %s270 = sadd.s32 %s30, %s269
          %s271 = smul.addr %s270, 128
          %s272 = scalar_lea.hbm %s1, %s271
          %s274 = sshll.u32 %s265, 4
          %s275 = int_to_ptr.vmem [resolvable:$true] %s274
          %277 = dma.hbm_to_vmem [thread:$0]  %s272, 128, %s275, %s262
        $region32: #{tpu_custom_call.1} parent=23 // pred_fallthru
          _
        // Predicated region
        $region33: #{tpu_custom_call.1} parent=23 // pred_check
          %p278 = pneg %p124
        $region34: #{tpu_custom_call.1} parent=23 // pred_check_branch
          %280 = sbr.rel (%p278) target = $region36
        $region35: #{tpu_custom_call.1} parent=23 // pred_region
          %s281 = sand.u32 %s22, 1
          %s282 = scalar_lea.sflag [#allocation9], %s281
          %s283 = sand.u32 %s114, 1
          %s284 = smul.addr %s283, 8
          %s285 = scalar_lea.vmem [#allocation10], %s284
          %s286 = sadd.s32 %s30, 1
          %p287 = scmp.lt.s32.totalorder %s286, 1
          %s288 = scalar_select %p287, %s286, 1
          %s290 = ssub.s32 128, 128
          %291 = vsyncadd %s282, %s290
          %s292 = smul.addr %s29, 2
          %s293 = sadd.s32 %s288, %s292
          %s294 = smul.addr %s293, 128
          %s295 = scalar_lea.hbm %s2, %s294
          %s297 = sshll.u32 %s285, 4
          %s298 = int_to_ptr.vmem [resolvable:$true] %s297
          %300 = dma.hbm_to_vmem [thread:$0]  %s295, 128, %s298, %s282
        $region36: #{tpu_custom_call.1} parent=23 // pred_fallthru
          _
      $region24: #{tpu_custom_call.1} parent=5 // pred_fallthru
        _
      %p301 = scmp.le.s32.totalorder 1, %s22
      %p302 = scmp.lt.s32.totalorder %s22, 5
      %p303 = pnand %p301, %p302
      %p304 = pneg %p303
      // Predicated region
      $region37: #{tpu_custom_call.1} parent=5 // pred_check
        _
      $region38: #{tpu_custom_call.1} parent=5 // pred_check_branch
        %306 = sbr.rel (%p303) target = $region40
      $region39: #{tpu_custom_call.1} parent=5 // pred_region
        %s307 = ssub.s32 %s22, 1
        %s308 = sand.u32 %s55, 1
        %s309 = scalar_lea.sflag [#allocation6], %s308
        %s310 = sand.u32 %s55, 1
        %s311 = smul.addr %s310, 8
        %s312 = scalar_lea.vmem [#allocation5], %s311
        // Predicated region
        $region41: #{tpu_custom_call.1} parent=39 // pred_check
          %p313 = pneg %p68
        $region42: #{tpu_custom_call.1} parent=39 // pred_check_branch
          %315 = sbr.rel (%p313) target = $region44
        $region43: #{tpu_custom_call.1} parent=39 // pred_region
          %316 = dma.done %s309, 128
        $region44: #{tpu_custom_call.1} parent=39 // pred_fallthru
          _
        %s317 = sand.u32 %s27, 1
        %s318 = scalar_lea.sflag [#allocation9], %s317
        %s319 = sand.u32 %s83, 1
        %s320 = smul.addr %s319, 8
        %s321 = scalar_lea.vmem [#allocation8], %s320
        // Predicated region
        $region45: #{tpu_custom_call.1} parent=39 // pred_check
          %p322 = pneg %p96
        $region46: #{tpu_custom_call.1} parent=39 // pred_check_branch
          %324 = sbr.rel (%p322) target = $region48
        $region47: #{tpu_custom_call.1} parent=39 // pred_region
          %325 = dma.done %s318, 128
        $region48: #{tpu_custom_call.1} parent=39 // pred_fallthru
          _
        %s326 = sand.u32 %s27, 1
        %s327 = scalar_lea.sflag [#allocation9], %s326
        %s328 = sand.u32 %s117, 1
        %s329 = smul.addr %s328, 8
        %s330 = scalar_lea.vmem [#allocation10], %s329
        // Predicated region
        $region49: #{tpu_custom_call.1} parent=39 // pred_check
          %p331 = pneg %p130
        $region50: #{tpu_custom_call.1} parent=39 // pred_check_branch
          %333 = sbr.rel (%p331) target = $region52
        $region51: #{tpu_custom_call.1} parent=39 // pred_region
          %334 = dma.done %s327, 128
        $region52: #{tpu_custom_call.1} parent=39 // pred_fallthru
          _
        // Predicated region
        $region53: #{tpu_custom_call.1} parent=39 // pred_check
          %p335 = pneg %p151
        $region54: #{tpu_custom_call.1} parent=39 // pred_check_branch
          %337 = sbr.rel (%p335) target = $region56
        $region55: #{tpu_custom_call.1} parent=39 // pred_region
          %338 = dma.done [#allocation12], 256
        $region56: #{tpu_custom_call.1} parent=39 // pred_fallthru
          _
        %s339 = sand.u32 %s55, 1
        %s340 = scalar_lea.sflag [#allocation6], %s339
        %s341 = sand.u32 %s55, 1
        %s342 = smul.addr %s341, 8
        %s343 = scalar_lea.vmem [#allocation5], %s342
        %p344 = pneg %p68
        %p345 = pneg %p65
        %s346 = sand.u32 %s27, 1
        %s347 = scalar_lea.sflag [#allocation9], %s346
        %s348 = sand.u32 %s83, 1
        %s349 = smul.addr %s348, 8
        %s350 = scalar_lea.vmem [#allocation8], %s349
        %p351 = pneg %p96
        %p352 = pneg %p93
        %s353 = sand.u32 %s27, 1
        %s354 = scalar_lea.sflag [#allocation9], %s353
        %s355 = sand.u32 %s117, 1
        %s356 = smul.addr %s355, 8
        %s357 = scalar_lea.vmem [#allocation10], %s356
        %p358 = pneg %p130
        %p359 = pneg %p127
        %p360 = pneg %p151
        %p361 = pneg %p148
        %p362 = pneg %p172
        %p363 = pneg %p169
        %p364 = pneg %p200
        %p365 = pneg %p197
        %s366 = sand.u32 %s187, 1
        %s367 = scalar_lea.sflag [#allocation7], %s366
        %s368 = sand.u32 %s187, 1
        %s369 = smul.addr %s368, 16
        %s370 = scalar_lea.vmem [#allocation13], %s369
        %s371 = ssub.s32 %s32, 1
        %p372 = scmp.gt.s32.totalorder %s371, 0
        %s373 = scalar_select %p372, %s371, 0
        %s374 = sadd.s32 %s32, 1
        %p375 = scmp.lt.s32.totalorder %s374, 1
        %s376 = scalar_select %p375, %s374, 1
        %vm377 = vcmask 7168
        %378 = vst.msk [vmem:[#allocation2] sm:$0xff] %vm377, 0.0
        %vm379 = vcmask 277768
        %380 = vst.msk [vmem:[#allocation2 + $0x8] sm:$0xff] %vm379, 0.0
        %v381 = vld [vmem:[%s312] sm:$0xff]
        %383 = vrot.lane.b32.xlu0 %v381, 17
        %v384 = vpop.permute.xlu0 %383
        %vm386 = vcmask 138248
        %387 = vst.msk [vmem:[#allocation2] sm:$0xff] %vm386, %v384
        %v388 = vld [vmem:[%s321] sm:$0xff]
        %390 = vrot.lane.b32.xlu0 %v388, 17
        %v391 = vpop.permute.xlu0 %390
        %vm393 = vcmask 1047688
        %394 = vst.msk [vmem:[#allocation2] sm:$0xff] %vm393, %v391
        %vm395 = vcmask 138240
        %396 = vst.msk [vmem:[#allocation2 + $0x8] sm:$0xff] %vm395, %v391
        %v397 = vld [vmem:[%s330] sm:$0xff]
        %399 = vrot.lane.b32.xlu0 %v397, 17
        %v400 = vpop.permute.xlu0 %399
        %vm402 = vcmask 269448
        %403 = vst.msk [vmem:[#allocation2 + $0x8] sm:$0xff] %vm402, %v400
        %p404 = scmp.eq.s32.totalorder %s32, 0
        // Predicated region
        $region57: #{tpu_custom_call.1} parent=39 // pred_check
          %p405 = pneg %p404
        $region58: #{tpu_custom_call.1} parent=39 // pred_check_branch
          %407 = sbr.rel (%p405) target = $region60
        $region59: #{tpu_custom_call.1} parent=39 // pred_region
          %408 = vst.msk [vmem:[#allocation2] sm:$0xff] %vm386, 0.0
        $region60: #{tpu_custom_call.1} parent=39 // pred_fallthru
          _
        %p409 = scmp.eq.s32.totalorder %s32, 1
        // Predicated region
        $region61: #{tpu_custom_call.1} parent=39 // pred_check
          %p410 = pneg %p409
        $region62: #{tpu_custom_call.1} parent=39 // pred_check_branch
          %412 = sbr.rel (%p410) target = $region64
        $region63: #{tpu_custom_call.1} parent=39 // pred_region
          %413 = vst.msk [vmem:[#allocation2 + $0x8] sm:$0xff] %vm402, 0.0
        $region64: #{tpu_custom_call.1} parent=39 // pred_fallthru
          _
        %v414 = vld [vmem:[#allocation2] sm:$0xff]
        %v415 = vld [vmem:[#allocation2 + $0x8] sm:$0xff]
        %v416 = vlaneseq
        %v417 = vand.u32 %v416, 127
        %v418 = vadd.s32 %v417, 128
        %vm419 = vcmp.lt.s32.totalorder %v417, 0
        %v420 = vsub.s32 0, %v417
        %v421 = vsel %vm419, %v420, %v417
        %v422 = vshrl.u32 %v421, 4
        %v423 = vand.u32 %v421, 15
        %v424 = vsub.s32 0, %v423
        %v425 = vsel %vm419, %v424, %v423
        %vm426 = vcmp.lt.s32.totalorder %v418, 0
        %v427 = vsub.s32 0, %v418
        %v428 = vsel %vm426, %v427, %v418
        %v429 = vshrl.u32 %v428, 4
        %v430 = vand.u32 %v428, 15
        %v431 = vsub.s32 0, %v430
        %v432 = vsel %vm426, %v431, %v430
        %vm433 = vcmp.ne.s32.totalorder %v425, 0
        %vm434 = vcmp.ne.s32.totalorder %v432, 0
        %vm435 = vcmp.lt.s32.totalorder %v425, 0
        %vm436 = vcmp.lt.s32.totalorder %v432, 0
        %vm437 = vmand %vm435, %vm433
        %vm438 = vmand %vm436, %vm434
        %v439 = vadd.s32 %v425, 16
        %v440 = vadd.s32 %v432, 16
        %v441 = vsel %vm437, %v439, %v425
        %v442 = vsel %vm438, %v440, %v432
        %vm443 = vcmp.gt.s32.totalorder %v441, 0
        %vm444 = vcmp.gt.s32.totalorder %v442, 0
        %v445 = vsel %vm443, 1, 0
        %v446 = vsel %vm444, 1, 0
        %vm447 = vcmp.eq.s32.totalorder %v445, 1
        %vm448 = vcmp.eq.s32.totalorder %v446, 1
        %v449 = vsel %vm447, %v414, 0.0
        %v450 = vsel %vm448, %v415, 0.0
        %vm451 = vcmp.lt.s32.totalorder %v441, 15
        %vm452 = vcmp.lt.s32.totalorder %v442, 15
        %v453 = vsel %vm451, 1, 0
        %v454 = vsel %vm452, 1, 0
        %vm455 = vcmp.eq.s32.totalorder %v453, 1
        %vm456 = vcmp.eq.s32.totalorder %v454, 1
        %459 = vrot.lane.b32.xlu0 %v414, 126
        %v460 = vpop.permute.xlu0 %459
        %461 = vrot.lane.b32.xlu0 %v415, 126
        %v462 = vpop.permute.xlu0 %461
        %vm463 = vcmask 1031168
        %v464 = vsel %vm463, %v460, %v462
        %v467 = vsel %vm455, %v464, 0.0
        %v468 = vsel %vm456, %v462, 0.0
        %469 = vst [vmem:[#allocation3] sm:$0xff] %v449
        %470 = vrot.lane.b32.xlu0 %v414, 127
        %v471 = vpop.permute.xlu0 %470
        %472 = vrot.lane.b32.xlu0 %v415, 127
        %v473 = vpop.permute.xlu0 %472
        %vm474 = vcmask 1039360
        %v475 = vsel %vm474, %v471, %v473
        %477 = vst [vmem:[#allocation3 + $0x8] sm:$0xff] %v475
        %478 = vst [vmem:[#allocation3 + $0x10] sm:$0xff] %v467
        %481 = vrot.lane.b32.xlu0 %v449, 112
        %v482 = vpop.permute.xlu0 %481
        %483 = vrot.lane.b32.xlu0 %v450, 112
        %v484 = vpop.permute.xlu0 %483
        %vm485 = vcmask 916480
        %v486 = vsel %vm485, %v482, %v484
        %488 = vst [vmem:[#allocation3 + $0x18] sm:$0xff] %v486
        %489 = vrot.lane.b32.xlu0 %v414, 111
        %v490 = vpop.permute.xlu0 %489
        %491 = vrot.lane.b32.xlu0 %v415, 111
        %v492 = vpop.permute.xlu0 %491
        %vm493 = vcmask 908288
        %v494 = vsel %vm493, %v490, %v492
        %496 = vst [vmem:[#allocation3 + $0x20] sm:$0xff] %v494
        %499 = vrot.lane.b32.xlu0 %v467, 112
        %v500 = vpop.permute.xlu0 %499
        %501 = vrot.lane.b32.xlu0 %v468, 112
        %v502 = vpop.permute.xlu0 %501
        %v503 = vsel %vm485, %v500, %v502
        %505 = vst [vmem:[#allocation3 + $0x28] sm:$0xff] %v503
        %506 = vrot.lane.b32.xlu0 %v449, 96
        %v507 = vpop.permute.xlu0 %506
        %508 = vrot.lane.b32.xlu0 %v450, 96
        %v509 = vpop.permute.xlu0 %508
        %vm510 = vcmask 785408
        %v511 = vsel %vm510, %v507, %v509
        %513 = vst [vmem:[#allocation3 + $0x30] sm:$0xff] %v511
        %514 = vrot.lane.b32.xlu0 %v414, 95
        %v515 = vpop.permute.xlu0 %514
        %516 = vrot.lane.b32.xlu0 %v415, 95
        %v517 = vpop.permute.xlu0 %516
        %vm518 = vcmask 777216
        %v519 = vsel %vm518, %v515, %v517
        %521 = vst [vmem:[#allocation3 + $0x38] sm:$0xff] %v519
        %522 = vrot.lane.b32.xlu0 %v467, 96
        %v523 = vpop.permute.xlu0 %522
        %524 = vrot.lane.b32.xlu0 %v468, 96
        %v525 = vpop.permute.xlu0 %524
        %v526 = vsel %vm510, %v523, %v525
        %528 = vst [vmem:[#allocation3 + $0x40] sm:$0xff] %v526
        %v529 = vld [vmem:[#allocation11] sm:$0xff]
        %v530 = vld [vmem:[#allocation11 + $0x8] sm:$0xff]
        %v531 = vld [vmem:[#allocation3] sm:$0xff]
        %v532 = vld [vmem:[#allocation3 + $0x8] sm:$0xff]
        %v533 = vld [vmem:[#allocation3 + $0x10] sm:$0xff]
        %v534 = vld [vmem:[#allocation3 + $0x18] sm:$0xff]
        %v535 = vld [vmem:[#allocation3 + $0x20] sm:$0xff]
        %v536 = vld [vmem:[#allocation3 + $0x28] sm:$0xff]
        %v537 = vld [vmem:[#allocation3 + $0x30] sm:$0xff]
        %v538 = vld [vmem:[#allocation3 + $0x38] sm:$0xff]
        %v539 = vld [vmem:[#allocation3 + $0x40] sm:$0xff]
        %vm540 = vcmask 588800
        %v542 = vsel %vm540, %v529, 0
        %v545 = vsel %vm540, %v530, 0
        %547 = vmatprep.subr.mxu0 0.0
        %548 = vmatpush1.msra.mxu0 0.0
        %549 = vmatprep.subr.mxu0 0.0
        %550 = vmatpush1.msra.mxu0 0.0
        %551 = vmatprep.subr.mxu0 0.0
        %552 = vmatpush1.msra.mxu0 0.0
        %553 = vmatprep.subr.mxu0 0.0
        %554 = vmatpush1.msra.mxu0 0.0
        %555 = vmatprep.subr.mxu0 0.0
        %556 = vmatpush1.msra.mxu0 0.0
        %557 = vmatprep.subr.mxu0 0.0
        %558 = vmatpush1.msra.mxu0 0.0
        %559 = vmatprep.subr.mxu0 0.0
        %560 = vmatpush1.msra.mxu0 0.0
        %561 = vmatprep.subr.mxu0 0.0
        %562 = vmatpush1.msra.mxu0 %v539
        %563 = vmatprep.subr.mxu0 0.0
        %564 = vmatpush1.msra.mxu0 %v538
        %565 = vmatprep.subr.mxu0 0.0
        %566 = vmatpush1.msra.mxu0 %v537
        %567 = vmatprep.subr.mxu0 0.0
        %568 = vmatpush1.msra.mxu0 %v536
        %569 = vmatprep.subr.mxu0 0.0
        %570 = vmatpush1.msra.mxu0 %v535
        %571 = vmatprep.subr.mxu0 0.0
        %572 = vmatpush1.msra.mxu0 %v534
        %573 = vmatprep.subr.mxu0 0.0
        %574 = vmatpush1.msra.mxu0 %v533
        %575 = vmatprep.subr.mxu0 0.0
        %576 = vmatpush1.msra.mxu0 %v532
        %577 = vmatprep.subr.mxu0 0.0
        %578 = vmatpush1.msra.mxu0 %v531
        %579 = vmatprep.subr.mxu0 0.0
        %580 = vmatpush2.msra.mxu0 0.0
        %581 = vmatprep.subr.mxu0 0.0
        %582 = vmatpush2.msra.mxu0 0.0
        %583 = vmatprep.subr.mxu0 0.0
        %584 = vmatpush2.msra.mxu0 0.0
        %585 = vmatprep.subr.mxu0 0.0
        %586 = vmatpush2.msra.mxu0 0.0
        %587 = vmatprep.subr.mxu0 0.0
        %588 = vmatpush2.msra.mxu0 0.0
        %589 = vmatprep.subr.mxu0 0.0
        %590 = vmatpush2.msra.mxu0 0.0
        %591 = vmatprep.subr.mxu0 0.0
        %592 = vmatpush2.msra.mxu0 0.0
        %593 = vmatprep.subr.mxu0 0.0
        %594 = vmatpush2.msra.mxu0 0.0
        %595 = vmatprep.subr.mxu0 0.0
        %596 = vmatpush2.msra.mxu0 0.0
        %597 = vmatprep.subr.mxu0 0.0
        %598 = vmatpush2.msra.mxu0 0.0
        %599 = vmatprep.subr.mxu0 0.0
        %600 = vmatpush2.msra.mxu0 0.0
        %601 = vmatprep.subr.mxu0 0.0
        %602 = vmatpush2.msra.mxu0 0.0
        %603 = vmatprep.subr.mxu0 0.0
        %604 = vmatpush2.msra.mxu0 0.0
        %605 = vmatprep.subr.mxu0 0.0
        %606 = vmatpush2.msra.mxu0 0.0
        %607 = vmatprep.subr.mxu0 0.0
        %608 = vmatpush2.msra.mxu0 0.0
        %609 = vmatprep.subr.mxu0 0.0
        %610 = vmatpush2.msra.mxu0 0.0
        %611 = vmatprep.mubr.f32.mxu0 0.0
        %612 = vmatmul.mubr.f32.gmra.mxu0 %v542
        %v613 = vpop.f32.mrf.mxu0
        %v614 = vadd.f32 0.0, %v613
        %v615 = vpop.f32.mrf.mxu0
        %616 = vmatprep.mubr.f32.mxu0 0.0
        %617 = vmatmul.mubr.f32.gmra.mxu0 %v545
        %v618 = vpop.f32.mrf.mxu0
        %v619 = vadd.f32 0.0, %v618
        %v620 = vpop.f32.mrf.mxu0
        %621 = vdwg.mxu0
        %s622 = sld [smem:[#allocation4]]
        %vm623 = vcmp.ge.f32.partialorder %v614, 0.0
        %vm624 = vcmp.ge.f32.partialorder %v619, 0.0
        %v625 = vstv %s622
        %v626 = vmul.f32 %v625, %v614
        %v627 = vmul.f32 %v625, %v619
        %v628 = vsel %vm623, %v614, %v626
        %v629 = vsel %vm624, %v619, %v627
        %630 = vst [vmem:[%s370] sm:$0xff] %v628
        %631 = vst [vmem:[%s370 + $0x8] sm:$0xff] %v629
        %s632 = sand.u32 %s187, 1
        %s633 = scalar_lea.sflag [#allocation7], %s632
        %s634 = sand.u32 %s187, 1
        %s635 = smul.addr %s634, 16
        %s636 = scalar_lea.vmem [#allocation13], %s635
        // Predicated region
        $region65: #{tpu_custom_call.1} parent=39 // pred_check
          %p637 = pneg %p197
        $region66: #{tpu_custom_call.1} parent=39 // pred_check_branch
          %639 = sbr.rel (%p637) target = $region68
        $region67: #{tpu_custom_call.1} parent=39 // pred_region
          %s641 = ssub.s32 256, 256
          %642 = vsyncadd %s633, %s641
          %s643 = smul.addr %s31, 4
          %s644 = sadd.s32 %s32, %s643
          %s645 = smul.addr %s644, 128
          %s646 = scalar_lea.hbm %s5, %s645
          %s647 = sshll.u32 %s636, 4
          %s648 = int_to_ptr.vmem [resolvable:$true] %s647
          %653 = dma.vmem_to_hbm [thread:$0]  %s648, 256, %s646, %s633, 128, 256, 8
        $region68: #{tpu_custom_call.1} parent=39 // pred_fallthru
          _
      $region40: #{tpu_custom_call.1} parent=5 // pred_fallthru
        _
      %p654 = scmp.le.s32.totalorder 2, %s22
      // Predicated region
      $region69: #{tpu_custom_call.1} parent=5 // pred_check
        %p655 = pneg %p654
      $region70: #{tpu_custom_call.1} parent=5 // pred_check_branch
        %657 = sbr.rel (%p655) target = $region72
      $region71: #{tpu_custom_call.1} parent=5 // pred_region
        %s658 = ssub.s32 %s22, 2
        // Predicated region
        $region73: #{tpu_custom_call.1} parent=71 // pred_check
          %p659 = pneg %p203
        $region74: #{tpu_custom_call.1} parent=71 // pred_check_branch
          %661 = sbr.rel (%p659) target = $region76
        $region75: #{tpu_custom_call.1} parent=71 // pred_region
          %s662 = sand.u32 %s188, 1
          %s663 = scalar_lea.sflag [#allocation7], %s662
          %s664 = sand.u32 %s188, 1
          %s665 = smul.addr %s664, 16
          %s666 = scalar_lea.vmem [#allocation13], %s665
          %667 = dma.done %s663, 256
        $region76: #{tpu_custom_call.1} parent=71 // pred_fallthru
          _
      $region72: #{tpu_custom_call.1} parent=5 // pred_fallthru
        _
    $region6: #{tpu_custom_call.1} parent=1 // loop_footer
      %s26 = sadd.s32 1, %s22
    $region7: #{tpu_custom_call.1} parent=1 // loop_footer_branch
      %21 = sbr.rel target = $region3
    $region8: #{tpu_custom_call.1} parent=1 // loop_exit
      _
    %668 = vsyncpa [#allocation6], 1
    %s669 = scalar_lea.sflag [#allocation6], 1
    %670 = vsyncpa %s669, 1
    %671 = vsyncpa [#allocation9], 1
    %s672 = scalar_lea.sflag [#allocation9], 1
    %673 = vsyncpa %s672, 1
    %674 = vsyncpa [#allocation12], 1
    %675 = vsyncpa [#allocation7], 1
    %s676 = scalar_lea.sflag [#allocation7], 1
    %677 = vsyncpa %s676, 1

</llo_original>
